<compile_context>
chip_gen: v7x
topology: tpu7x:2x2x1
jax: 0.10.0
libtpu: 0.0.40
codegen_flags: <defaults>
</compile_context>

<pallas_src>
import functools

import jax
import jax.numpy as jnp
from jax import lax
from jax.experimental import pallas as pl
from jax.experimental.pallas import tpu as pltpu

EPS = 1e-5
MATMUL_DTYPE = jnp.bfloat16   # MXU operand dtype (f32 accumulation)
STORE_DTYPE = jnp.bfloat16    # HBM dtype of the u / z intermediates


# ---------------------------------------------------------------------------
# small in-kernel helpers
# ---------------------------------------------------------------------------
def _tile_stats(v, fold, cnt):
  """Per-tile BatchNorm partials from v (fold*C, L): returns (C, 2) holding
  [sum, centred sum-of-squares] per channel, folded over `fold` phase groups."""
  c = v.shape[0] // fold
  s_rows = jnp.sum(v, axis=1, keepdims=True)                 # (fold*C, 1)
  s = s_rows[0:c]
  for t in range(1, fold):
    s = s + s_rows[t * c:(t + 1) * c]
  mu = s * (1.0 / cnt)                                       # (C, 1)
  mu_rep = mu if fold == 1 else jnp.concatenate([mu] * fold, axis=0)
  d = v - mu_rep
  q_rows = jnp.sum(d * d, axis=1, keepdims=True)
  q = q_rows[0:c]
  for t in range(1, fold):
    q = q + q_rows[t * c:(t + 1) * c]
  return jnp.concatenate([s, q], axis=1)                     # (C, 2)


def _bn_affine(st, gamma, beta, cnt):
  """Combine per-tile [sum, centred sumsq] stats (T, C, 2) with Chan's
  parallel-variance formula (equal per-tile counts `cnt`); returns (scale,
  shift) column vectors (C, 1) so that bn(x) = x * scale + shift."""
  t_tiles = st.shape[0]
  total = cnt * t_tiles
  s_t = st[:, :, 0:1]                                        # (T, C, 1)
  q_t = st[:, :, 1:2]
  s = jnp.sum(s_t, axis=0)                                   # (C, 1)
  mean = s * (1.0 / total)
  d = s_t * (1.0 / cnt) - mean[None, :, :]
  m2 = jnp.sum(q_t, axis=0) + cnt * jnp.sum(d * d, axis=0)
  var = jnp.maximum(m2 * (1.0 / total), 0.0)
  scale = gamma * lax.rsqrt(var + EPS)
  return scale, beta - mean * scale


def _rep4(v):
  # replicate a (C, 1) per-channel vector over the 4 parity-phase row blocks
  return jnp.concatenate([v, v, v, v], axis=0)


# ---------------------------------------------------------------------------
# kernels (channels on sublanes, pixels on lanes)
# ---------------------------------------------------------------------------
def _conv1_kernel(x_ref, w1_ref, b1_ref, u_ref, st_ref, *, cnt):
  """conv1 (1x1 == channel matmul) + BN1 per-tile centred partial sums."""
  u = jnp.dot(w1_ref[...], x_ref[0].astype(MATMUL_DTYPE),
              preferred_element_type=jnp.float32) + b1_ref[...]
  u_ref[0] = u.astype(u_ref.dtype)
  st_ref[0] = _tile_stats(u, fold=1, cnt=cnt)


def _deconv_kernel(u_ref, st1_ref, g1_ref, be1_ref, w2_ref, b2_ref,
                   z_ref, st2_ref, *, H, W, cnt1):
  """BN1-apply + ReLU, then ConvTranspose2d(3, s=2, p=1, op=1) as four
  accumulated dots against per-tap weight blocks; output rows pack the four
  parity phases [ee|eo|oe|oo] on the channel (sublane) axis."""
  P = H * W
  sc1, sh1 = _bn_affine(st1_ref[...], g1_ref[...], be1_ref[...], cnt1)
  y = jnp.maximum(u_ref[0].astype(jnp.float32) * sc1 + sh1, 0.0)   # (c4, P)

  # validity masks from a lane iota (no mask tensors streamed from HBM)
  p = lax.broadcasted_iota(jnp.int32, (1, P), 1)
  mr = (p % W) < (W - 1)               # pixel (a, b+1) inside the image
  md = p < (H - 1) * W                 # pixel (a+1, b) inside the image

  # shifted taps via lane rolls (XLU); masks zero the wrapped pixels
  yb = y.astype(MATMUL_DTYPE)
  y_r = jnp.where(mr, pltpu.roll(y, (P - 1) % P, axis=1),
                  0.0).astype(MATMUL_DTYPE)
  y_d = jnp.where(md, pltpu.roll(y, (P - W) % P, axis=1),
                  0.0).astype(MATMUL_DTYPE)
  y_rd = jnp.where(mr & md, pltpu.roll(y, (P - W - 1) % P, axis=1),
                   0.0).astype(MATMUL_DTYPE)

  z = jnp.dot(w2_ref[0], yb, preferred_element_type=jnp.float32)
  z = z + jnp.dot(w2_ref[1], y_r, preferred_element_type=jnp.float32)
  z = z + jnp.dot(w2_ref[2], y_d, preferred_element_type=jnp.float32)
  z = z + jnp.dot(w2_ref[3], y_rd, preferred_element_type=jnp.float32)
  z = z + b2_ref[...]
  z_ref[0] = z.astype(z_ref.dtype)
  st2_ref[0] = _tile_stats(z, fold=4, cnt=4.0 * P)


def _conv3_from_z(z_ref, st2_ref, g2_ref, be2_ref, w3_ref, b3_ref, cnt2):
  """BN2-apply + ReLU + block-diagonal 1x1 conv3 (shared by passes 3 and 4)."""
  sc2, sh2 = _bn_affine(st2_ref[...], g2_ref[...], be2_ref[...], cnt2)
  a = jnp.maximum(z_ref[0].astype(jnp.float32) * _rep4(sc2) + _rep4(sh2), 0.0)
  return jnp.dot(w3_ref[...], a.astype(MATMUL_DTYPE),
                 preferred_element_type=jnp.float32) + b3_ref[...]


def _conv3_stats_kernel(z_ref, st2_ref, g2_ref, be2_ref, w3_ref, b3_ref,
                        st3_ref, *, cnt2, tp):
  """Pass 3: BN3 per-tile partials only -- conv3 activations are recomputed in
  pass 4, so nothing large is written to HBM here."""
  o = _conv3_from_z(z_ref, st2_ref, g2_ref, be2_ref, w3_ref, b3_ref, cnt2)
  st3_ref[0] = _tile_stats(o, fold=4, cnt=4.0 * tp)


def _output_kernel(z_ref, st2_ref, g2_ref, be2_ref, w3_ref, b3_ref,
                   st3_ref, g3_ref, be3_ref, out_ref, *, cnt2, cnt3):
  """Pass 4: recompute conv3 from z, BN3-apply + ReLU, lane-dense final store."""
  o = _conv3_from_z(z_ref, st2_ref, g2_ref, be2_ref, w3_ref, b3_ref, cnt2)
  sc3, sh3 = _bn_affine(st3_ref[...], g3_ref[...], be3_ref[...], cnt3)
  out_ref[0] = jnp.maximum(o * _rep4(sc3) + _rep4(sh3), 0.0)


# ---------------------------------------------------------------------------
# wrapper glue
# ---------------------------------------------------------------------------
def _pick_tile(P, bytes_per_pixel, vmem_budget):
  """Largest lane-dense pixel tile (multiple of 128 dividing P) that fits the
  per-step VMEM budget; keep >= 2 tiles per image when possible so the
  BlockSpec pipeline has something to overlap."""
  if P % 128 != 0:
    return P, 1
  cap = max(128, vmem_budget // max(bytes_per_pixel, 1))
  if P >= 256:
    cap = min(cap, P // 2)
  tp = 128
  while tp * 2 <= cap and P % (tp * 2) == 0:
    tp *= 2
  return tp, P // tp


def _full_spec(shape, grid_rank):
  nd = len(shape)
  if grid_rank == 1:
    return pl.BlockSpec(shape, lambda i: (0,) * nd)
  return pl.BlockSpec(shape, lambda i, j: (0,) * nd)


def decoder_block(x_nchw, params):
  N, Cin, H, W = x_nchw.shape
  assert Cin % 4 == 0
  c4 = Cin // 4
  Cout = params['w3'].shape[1]
  P = H * W
  C2, C3 = 4 * c4, 4 * Cout
  f32 = jnp.float32

  # NCHW is already channels-first: pixels flatten onto the lane axis for free.
  x = x_nchw.astype(f32).reshape(N, Cin, P)

  # Lane (pixel) tile from a conservative VMEM budget (v7x: 32 MiB scoped).
  bytes_pp = 2 * (4 * Cin + 2 * c4 + 6 * C2 + 4 * C3)
  TP, NPT = _pick_tile(P, bytes_pp, vmem_budget=8 * 1024 * 1024)
  T1 = N * NPT

  cp2d = pltpu.CompilerParams(dimension_semantics=("parallel", "parallel"),
                              vmem_limit_bytes=32 * 1024 * 1024)
  cp1d = pltpu.CompilerParams(dimension_semantics=("parallel",),
                              vmem_limit_bytes=32 * 1024 * 1024)

  # ---- static weight packing (pure glue, done once) ----
  w1t = params['w1'].T.astype(MATMUL_DTYPE)                        # (c4, Cin)
  b1c = params['b1'].reshape(c4, 1).astype(f32)
  g1c = params['g1'].reshape(c4, 1).astype(f32)
  be1c = params['be1'].reshape(c4, 1).astype(f32)

  W2 = params['w2'].astype(f32)                                    # (ky,kx,ci,co)
  Z = jnp.zeros((c4, c4), f32)
  def _t(ky, kx):
    return W2[ky, kx].T                                            # (co, ci)
  # per-tap (4*c4, c4) blocks; row blocks = output phases [ee, eo, oe, oo]
  w2t = jnp.stack([
      jnp.concatenate([_t(1, 1), _t(1, 2), _t(2, 1), _t(2, 2)], axis=0),  # y(a,b)
      jnp.concatenate([Z,        _t(1, 0), Z,        _t(2, 0)], axis=0),  # y(a,b+1)
      jnp.concatenate([Z,        Z,        _t(0, 1), _t(0, 2)], axis=0),  # y(a+1,b)
      jnp.concatenate([Z,        Z,        Z,        _t(0, 0)], axis=0),  # y(a+1,b+1)
  ], axis=0).astype(MATMUL_DTYPE)                                   # (4, C2, c4)
  b2c = jnp.tile(params['b2'].reshape(c4, 1), (4, 1)).astype(f32)   # (C2, 1)
  g2c = params['g2'].reshape(c4, 1).astype(f32)
  be2c = params['be2'].reshape(c4, 1).astype(f32)

  w3blk = jnp.kron(jnp.eye(4, dtype=f32),
                   params['w3'].T).astype(MATMUL_DTYPE)             # (C3, C2)
  b3c = jnp.tile(params['b3'].reshape(Cout, 1), (4, 1)).astype(f32) # (C3, 1)
  g3c = params['g3'].reshape(Cout, 1).astype(f32)
  be3c = params['be3'].reshape(Cout, 1).astype(f32)

  # ---- pass 1: conv1 (channel matmul) + BN1 per-tile partials ----
  u, st1 = pl.pallas_call(
      functools.partial(_conv1_kernel, cnt=float(TP)),
      grid=(N, NPT),
      in_specs=[pl.BlockSpec((1, Cin, TP), lambda i, j: (i, 0, j)),
                _full_spec((c4, Cin), 2), _full_spec((c4, 1), 2)],
      out_specs=(pl.BlockSpec((1, c4, TP), lambda i, j: (i, 0, j)),
                 pl.BlockSpec((1, c4, 2), lambda i, j: (i * NPT + j, 0, 0))),
      out_shape=(jax.ShapeDtypeStruct((N, c4, P), STORE_DTYPE),
                 jax.ShapeDtypeStruct((T1, c4, 2), f32)),
      compiler_params=cp2d,
  )(x, w1t, b1c)

  # ---- pass 2: BN1-apply + ReLU + fused deconv (whole image per step) ----
  z, st2 = pl.pallas_call(
      functools.partial(_deconv_kernel, H=H, W=W, cnt1=float(TP)),
      grid=(N,),
      in_specs=[pl.BlockSpec((1, c4, P), lambda i: (i, 0, 0)),
                _full_spec((T1, c4, 2), 1),
                _full_spec((c4, 1), 1), _full_spec((c4, 1), 1),
                _full_spec((4, C2, c4), 1), _full_spec((C2, 1), 1)],
      out_specs=(pl.BlockSpec((1, C2, P), lambda i: (i, 0, 0)),
                 pl.BlockSpec((1, c4, 2), lambda i: (i, 0, 0))),
      out_shape=(jax.ShapeDtypeStruct((N, C2, P), STORE_DTYPE),
                 jax.ShapeDtypeStruct((N, c4, 2), f32)),
      compiler_params=cp1d,
  )(u, st1, g1c, be1c, w2t, b2c)

  # ---- pass 3: BN2-apply + conv3 -> BN3 partials only (no `o` in HBM) ----
  st3 = pl.pallas_call(
      functools.partial(_conv3_stats_kernel, cnt2=float(4 * P), tp=float(TP)),
      grid=(N, NPT),
      in_specs=[pl.BlockSpec((1, C2, TP), lambda i, j: (i, 0, j)),
                _full_spec((N, c4, 2), 2),
                _full_spec((c4, 1), 2), _full_spec((c4, 1), 2),
                _full_spec((C3, C2), 2), _full_spec((C3, 1), 2)],
      out_specs=pl.BlockSpec((1, Cout, 2), lambda i, j: (i * NPT + j, 0, 0)),
      out_shape=jax.ShapeDtypeStruct((T1, Cout, 2), f32),
      compiler_params=cp2d,
  )(z, st2, g2c, be2c, w3blk, b3c)

  # ---- pass 4: recompute conv3, BN3-apply + ReLU, lane-dense final store ----
  outp = pl.pallas_call(
      functools.partial(_output_kernel, cnt2=float(4 * P), cnt3=float(4 * TP)),
      grid=(N, NPT),
      in_specs=[pl.BlockSpec((1, C2, TP), lambda i, j: (i, 0, j)),
                _full_spec((N, c4, 2), 2),
                _full_spec((c4, 1), 2), _full_spec((c4, 1), 2),
                _full_spec((C3, C2), 2), _full_spec((C3, 1), 2),
                _full_spec((T1, Cout, 2), 2),
                _full_spec((Cout, 1), 2), _full_spec((Cout, 1), 2)],
      out_specs=pl.BlockSpec((1, C3, TP), lambda i, j: (i, 0, j)),
      out_shape=jax.ShapeDtypeStruct((N, C3, P), f32),
      compiler_params=cp2d,
  )(z, st2, g2c, be2c, w3blk, b3c, st3, g3c, be3c)

  # un-pack the parity phases [ee, eo, oe, oo] -> NCHW (single XLA transpose)
  out = outp.reshape(N, 2, 2, Cout, H, W)
  out = out.transpose(0, 3, 4, 1, 5, 2).reshape(N, Cout, 2 * H, 2 * W)
  return out


# ---------------------------------------------------------------------------
# parameters & references
# ---------------------------------------------------------------------------
def init_params(key, in_channels, n_filters):
  c4 = in_channels // 4
  ks = jax.random.split(key, 12)

  def nrm(k, shape, scale):
    return (scale * jax.random.normal(k, shape)).astype(jnp.float32)

  return dict(
      # conv1: torch weight (c4, Cin, 1, 1)  -> stored as (Cin, c4)
      w1=nrm(ks[0], (in_channels, c4), 0.3), b1=nrm(ks[1], (1, c4), 0.1),
      g1=(1.0 + 0.1 * jax.random.normal(ks[2], (1, c4))).astype(jnp.float32),
      be1=nrm(ks[3], (1, c4), 0.1),
      # deconv2: torch weight (c4, c4, 3, 3) -> stored as (ky, kx, ci, co)
      w2=nrm(ks[4], (3, 3, c4, c4), 0.3), b2=nrm(ks[5], (1, c4), 0.1),
      g2=(1.0 + 0.1 * jax.random.normal(ks[6], (1, c4))).astype(jnp.float32),
      be2=nrm(ks[7], (1, c4), 0.1),
      # conv3: torch weight (n_filters, c4, 1, 1) -> stored as (c4, n_filters)
      w3=nrm(ks[8], (c4, n_filters), 0.3), b3=nrm(ks[9], (1, n_filters), 0.1),
      g3=(1.0 + 0.1 * jax.random.normal(ks[10], (1, n_filters))).astype(jnp.float32),
      be3=nrm(ks[11], (1, n_filters), 0.1),
  )


def reference_nchw(x_nchw, params, matmul_dtype=jnp.float32,
                   quantize_store=False):
  """Pure-JAX (XLA) reference of the same forward.  `matmul_dtype` and
  `quantize_store` let us build a precision-matched reference (bf16 MXU
  operands, f32 accumulation, bf16 storage of the u/z intermediates)."""
  f32 = jnp.float32
  md = matmul_dtype
  x = jnp.transpose(x_nchw, (0, 2, 3, 1)).astype(f32)

  def q(t):
    return t.astype(jnp.bfloat16).astype(f32) if quantize_store else t

  def bn_affine(t, g, b):
    mean = jnp.mean(t, axis=(0, 1, 2), keepdims=True)
    var = jnp.mean((t - mean) ** 2, axis=(0, 1, 2), keepdims=True)
    scale = g.reshape(1, 1, 1, -1) / jnp.sqrt(var + EPS)
    return scale, b.reshape(1, 1, 1, -1) - mean * scale

  y0 = jnp.einsum('nhwc,cd->nhwd', x.astype(md), params['w1'].astype(md),
                  preferred_element_type=f32) + params['b1'].reshape(1, 1, 1, -1)
  sc, sh = bn_affine(y0, params['g1'], params['be1'])
  y = jnp.maximum(q(y0) * sc + sh, 0.0)

  # ConvTranspose2d(3, s=2, p=1, op=1) == dilated conv with flipped kernel.
  wflip = params['w2'][::-1, ::-1]
  z0 = lax.conv_general_dilated(
      y.astype(md), wflip.astype(md), window_strides=(1, 1),
      padding=((1, 2), (1, 2)), lhs_dilation=(2, 2),
      dimension_numbers=('NHWC', 'HWIO', 'NHWC'),
      preferred_element_type=f32) + params['b2'].reshape(1, 1, 1, -1)
  sc, sh = bn_affine(z0, params['g2'], params['be2'])
  z = jnp.maximum(q(z0) * sc + sh, 0.0)

  o0 = jnp.einsum('nhwc,cd->nhwd', z.astype(md), params['w3'].astype(md),
                  preferred_element_type=f32) + params['b3'].reshape(1, 1, 1, -1)
  sc, sh = bn_affine(o0, params['g3'], params['be3'])
  o = jnp.maximum(o0 * sc + sh, 0.0)
  return jnp.transpose(o, (0, 3, 1, 2))


if __name__ == "__main__":
  key = jax.random.PRNGKey(0)
  kx, kp = jax.random.split(key)

  N, Cin, H, W = 2, 16, 16, 16
  n_filters = 8

  x = jax.random.normal(kx, (N, Cin, H, W), dtype=jnp.float32)
  params = init_params(kp, Cin, n_filters)

  out = jax.block_until_ready(decoder_block(x, params))
  assert out.shape == (N, n_filters, 2 * H, 2 * W), out.shape

  # Tight check vs a reference with the same precision policy (bf16 MXU
  # operands, f32 accumulation, bf16 HBM storage of the two intermediates).
  ref_m = jax.block_until_ready(
      reference_nchw(x, params, MATMUL_DTYPE, quantize_store=True))
  if not jnp.allclose(out, ref_m, atol=1e-2, rtol=1e-2):
    err = float(jnp.max(jnp.abs(out - ref_m)))
    raise AssertionError(f"mismatch vs precision-matched reference, max|err|={err}")

  # Loose sanity check vs the pure-f32 module forward (bf16 operands/storage
  # trade ~1e-2-level deviations for MXU throughput and halved HBM traffic).
  ref_f = jax.block_until_ready(reference_nchw(x, params, jnp.float32))
  if not jnp.allclose(out, ref_f, atol=2e-1, rtol=2e-1):
    err = float(jnp.max(jnp.abs(out - ref_f)))
    raise AssertionError(f"mismatch vs f32 reference, max|err|={err}")

  print("KERNEL_OK")
</pallas_src>

<mosaic_0001>
module attributes {stable_mosaic.version = 11 : i64} {
  func.func @_conv1_kernel(%arg0: i32, %arg1: i32, %arg2: memref<1x16x128xf32, #tpu.memory_space<vmem>>, %arg3: memref<4x16xbf16, #tpu.memory_space<vmem>>, %arg4: memref<4x1xf32, #tpu.memory_space<vmem>>, %arg5: memref<1x4x128xbf16, #tpu.memory_space<vmem>>, %arg6: memref<1x4x2xf32, #tpu.memory_space<vmem>>) attributes {dimension_semantics = [#tpu.dimension_semantics<parallel>, #tpu.dimension_semantics<parallel>], iteration_bounds = array<i64: 2, 2>, scalar_prefetch = 0 : i64, scratch_operands = 0 : i64, tpu.core_type = #tpu.core_type<tc>, window_params = [{transform_indices = @transform_0, window_bounds = array<i64: 1, 16, 128>}, {pipeline_mode = #tpu.pipeline_mode<synchronous>, transform_indices = @transform_1, window_bounds = array<i64: 4, 16>}, {pipeline_mode = #tpu.pipeline_mode<synchronous>, transform_indices = @transform_2, window_bounds = array<i64: 4, 1>}, {transform_indices = @transform_3, window_bounds = array<i64: 1, 4, 128>}, {transform_indices = @transform_4, window_bounds = array<i64: 1, 4, 2>}]} {
    %c0 = arith.constant 0 : index
    %c0_0 = arith.constant 0 : index
    %0 = vector.load %arg3[%c0, %c0_0] : memref<4x16xbf16, #tpu.memory_space<vmem>>, vector<4x16xbf16>
    %c0_1 = arith.constant 0 : index
    %c0_2 = arith.constant 0 : index
    %c0_3 = arith.constant 0 : index
    %1 = vector.load %arg2[%c0_1, %c0_2, %c0_3] : memref<1x16x128xf32, #tpu.memory_space<vmem>>, vector<1x16x128xf32>
    %2 = vector.shape_cast %1 : vector<1x16x128xf32> to vector<16x128xf32>
    %3 = arith.truncf %2 : vector<16x128xf32> to vector<16x128xbf16>
    %cst = arith.constant dense<0.000000e+00> : vector<4x128xf32>
    %4 = tpu.matmul %0, %3, %cst {dimension_numbers = #tpu.dot_dimension_numbers<[1], [0], [0], [1], [0, 0, 1, 1], [], []>} : vector<4x16xbf16>, vector<16x128xbf16>, vector<4x128xf32> -> vector<4x128xf32>
    %c0_4 = arith.constant 0 : index
    %c0_5 = arith.constant 0 : index
    %5 = vector.load %arg4[%c0_4, %c0_5] : memref<4x1xf32, #tpu.memory_space<vmem>>, vector<4x1xf32>
    %6 = vector.broadcast %5 : vector<4x1xf32> to vector<4x128xf32>
    %7 = arith.addf %4, %6 : vector<4x128xf32>
    %8 = arith.truncf %7 : vector<4x128xf32> to vector<4x128xbf16>
    %c0_6 = arith.constant 0 : index
    %c0_7 = arith.constant 0 : index
    %c0_8 = arith.constant 0 : index
    %9 = vector.load %arg5[%c0_6, %c0_7, %c0_8] : memref<1x4x128xbf16, #tpu.memory_space<vmem>>, vector<1x4x128xbf16>
    %10 = vector.shape_cast %9 : vector<1x4x128xbf16> to vector<4x128xbf16>
    %11 = vector.shape_cast %8 : vector<4x128xbf16> to vector<1x4x128xbf16>
    tpu.vector_store %arg5[%c0_6, %c0_7, %c0_8], %11 {strides = array<i32>} : memref<1x4x128xbf16, #tpu.memory_space<vmem>>, vector<1x4x128xbf16>,
    %cst_9 = arith.constant dense<0.000000e+00> : vector<4xf32>
    %12 = vector.multi_reduction <add>, %7, %cst_9 [1] : vector<4x128xf32> to vector<4xf32>
    %13 = vector.shape_cast %12 : vector<4xf32> to vector<4x1xf32>
    %cst_10 = arith.constant 7.812500e-03 : f32
    %14 = vector.broadcast %cst_10 : f32 to vector<4x1xf32>
    %15 = arith.mulf %13, %14 : vector<4x1xf32>
    %16 = vector.broadcast %15 : vector<4x1xf32> to vector<4x128xf32>
    %17 = arith.subf %7, %16 : vector<4x128xf32>
    %18 = arith.mulf %17, %17 : vector<4x128xf32>
    %cst_11 = arith.constant dense<0.000000e+00> : vector<4xf32>
    %19 = vector.multi_reduction <add>, %18, %cst_11 [1] : vector<4x128xf32> to vector<4xf32>
    %20 = vector.shape_cast %19 : vector<4xf32> to vector<4x1xf32>
    %21 = tpu.concatenate %13, %20 in 1 : vector<4x1xf32>, vector<4x1xf32> -> vector<4x2xf32>
    %c0_12 = arith.constant 0 : index
    %c0_13 = arith.constant 0 : index
    %c0_14 = arith.constant 0 : index
    %22 = vector.load %arg6[%c0_12, %c0_13, %c0_14] : memref<1x4x2xf32, #tpu.memory_space<vmem>>, vector<1x4x2xf32>
    %23 = vector.shape_cast %22 : vector<1x4x2xf32> to vector<4x2xf32>
    %24 = vector.shape_cast %21 : vector<4x2xf32> to vector<1x4x2xf32>
    tpu.vector_store %arg6[%c0_12, %c0_13, %c0_14], %24 {strides = array<i32>} : memref<1x4x2xf32, #tpu.memory_space<vmem>>, vector<1x4x2xf32>,
    return
  }
  func.func @transform_0(%arg0: i32, %arg1: i32) -> (i32, i32, i32) {
    %c0_i32 = arith.constant 0 : i32
    %c0_i32_0 = arith.constant 0 : i32
    return %arg0, %c0_i32, %arg1 : i32, i32, i32
  }
  func.func @transform_1(%arg0: i32, %arg1: i32) -> (i32, i32) {
    %c0_i32 = arith.constant 0 : i32
    %c0_i32_0 = arith.constant 0 : i32
    %c0_i32_1 = arith.constant 0 : i32
    return %c0_i32, %c0_i32_0 : i32, i32
  }
  func.func @transform_2(%arg0: i32, %arg1: i32) -> (i32, i32) {
    %c0_i32 = arith.constant 0 : i32
    %c0_i32_0 = arith.constant 0 : i32
    %c0_i32_1 = arith.constant 0 : i32
    return %c0_i32, %c0_i32_0 : i32, i32
  }
  func.func @transform_3(%arg0: i32, %arg1: i32) -> (i32, i32, i32) {
    %c0_i32 = arith.constant 0 : i32
    %c0_i32_0 = arith.constant 0 : i32
    return %arg0, %c0_i32, %arg1 : i32, i32, i32
  }
  func.func @transform_4(%arg0: i32, %arg1: i32) -> (i32, i32, i32) {
    %c2_i32 = arith.constant 2 : i32
    %0 = arith.muli %arg0, %c2_i32 : i32
    %1 = arith.addi %0, %arg1 : i32
    %c0_i32 = arith.constant 0 : i32
    %c0_i32_0 = arith.constant 0 : i32
    %c0_i32_1 = arith.constant 0 : i32
    return %1, %c0_i32, %c0_i32_0 : i32, i32, i32
  }
}

</mosaic_0001>

<llo_original>
// kernel: tpu_custom_call.1
$region0: #{tpu_custom_call.1}
  #allocation0 [shape = 'u32[]', space=smem, size = 0x4, offset = 0x4, fixed_abs, tag = 'smem constant byte address 0x4 - core index']
  #allocation1 [shape = 'u32[144,128]{1,0:T(1,128)}', space=vmem, size = 0x12000, scoped, tag = 'internal scratch']
  %s0 = inlined_call_operand.hbm [shape: f32[2,16,256], index: 0, kind: input, shape index: {}]
  %s1 = inlined_call_operand.vmem [shape: bf16[4,16], index: 1, kind: input, shape index: {}]
  %s2 = inlined_call_operand.vmem [shape: f32[4,1], index: 2, kind: input, shape index: {}]
  %s3 = inlined_call_operand.hbm [shape: bf16[2,4,256], index: 3, kind: output, shape index: {0}]
  %s4 = inlined_call_operand.vmem [shape: f32[4,4,2], index: 4, kind: output, shape index: {1}]
  %5 = xla_tuple %s3, %s4
  %s6 = sld [smem:[#allocation0]]
  $region57: #{tpu_custom_call.1} parent=0
    _
  %s8 = ssub.s32 1, %s6
  %s9 = scalar_select 0, %s8, %s6
  $region1: #{tpu_custom_call.1} parent=0
    #allocation2 [shape = 'u8[16384]{0}', space=vmem, size = 0x4000, scoped, tag = 'input window, operand 0']
    #allocation3 [shape = 's32[2]{0}', space=sflag, size = 0x8, scoped, tag = 'scoped memory for tpu_custom_call.1']
    #allocation4 [shape = 's32[2]{0}', space=sflag, size = 0x8, scoped, tag = 'scoped memory for tpu_custom_call.1']
    #allocation5 [shape = 'u8[2048]{0}', space=vmem, size = 0x800, scoped, tag = 'output window, operand 0']
    %10 = vsyncpa [#allocation3], 0
    %s11 = scalar_lea.sflag [#allocation3], 1
    %12 = vsyncpa %s11, 0
    %13 = vsyncpa [#allocation4], 0
    %s14 = scalar_lea.sflag [#allocation4], 1
    %15 = vsyncpa %s14, 0
    loop: start=0, step=1, limit=6
    $region2: #{tpu_custom_call.1} parent=1 // loop_pre_header
      _
    $region3: #{tpu_custom_call.1} parent=1 // loop_header
      %s17 = sphi 0, %s21
      %p18 = scmp.ge.s32.totalorder %s17, 6
      %s24 = sphi 0, %s36
      %s25 = sphi 0, %s32
      %s26 = sphi 0, %s24
      %s27 = sphi 0, %s25
      %s28 = sphi 0, %s26
      %s29 = sphi 0, %s27
      %s41 = sphi 0, %s43
      %s44 = sphi 0, %s41
      %s45 = sphi 0, %s44
      %s61 = sphi 0, %s45
      %s65 = sphi 0, %s65
      %s67 = sphi 0, %s65
      %s68 = sphi 0, %s67
      %s82 = sphi 0, %s68
      %s86 = sphi 0, %s86
      %s88 = sphi 0, %s86
      %s89 = sphi 0, %s88
      %s103 = sphi 0, %s89
      %s111 = sphi 0, %s113
      %s114 = sphi 0, %s111
      %s115 = sphi 0, %s114
      %s131 = sphi 0, %s115
      %s141 = sphi 0, %s143
      %s144 = sphi 0, %s141
      %s145 = sphi 0, %s144
      %s161 = sphi 0, %s145
    $region4: #{tpu_custom_call.1} parent=1 // loop_header_branch
      %20 = sbr.rel (%p18) target = $region8
    $region5: #{tpu_custom_call.1} parent=1 // loop_body
      %s22 = ssub.s32 %s17, 1
      %s23 = ssub.s32 %s17, 2
      %s30 = sadd.s32 1, %s25
      %p31 = scmp.ge.s32.totalorder %s30, 2
      %s32 = scalar_select %p31, 0, %s30
      %s33 = sadd.s32 1, %s24
      %s34 = scalar_select %p31, %s33, %s24
      %p35 = scmp.ge.s32.totalorder %s34, 2
      %s36 = scalar_select %p35, 0, %s34
      %s37 = ssub.s32 %s24, %s36
      %s38 = ssub.s32 %s25, %s32
      %s39 = sor.u32 %s37, %s38
      %p40 = scmp.eq.s32.totalorder %s39, 0
      %s42 = sadd.s32 %s41, 1
      %s43 = scalar_select %p40, %s41, %s42
      %p46 = pneg %p40
      %p47 = scmp.eq.s32.totalorder %s17, 3
      %p48 = por %p46, %p47
      %p49 = scmp.ne.s32.totalorder %s41, %s44
      %p50 = scmp.eq.s32.totalorder %s17, 0
      %p51 = por %p49, %p50
      %p52 = scmp.ne.s32.totalorder %s41, %s44
      %p53 = scmp.eq.s32.totalorder %s22, 3
      %p54 = por %p52, %p53
      %p55 = scmp.ne.s32.totalorder %s44, %s45
      %p56 = scmp.eq.s32.totalorder %s22, 0
      %p57 = por %p55, %p56
      %p58 = scmp.ne.s32.totalorder %s44, %s45
      %p59 = scmp.eq.s32.totalorder %s23, 3
      %p60 = por %p58, %p59
      %p62 = scmp.ne.s32.totalorder %s45, %s61
      %p63 = scmp.eq.s32.totalorder %s23, 0
      %p64 = por %p62, %p63
      %s66 = sadd.s32 %s65, 1
      %p69 = scmp.eq.s32.totalorder %s17, 3
      %p70 = scmp.ne.s32.totalorder %s65, %s67
      %p71 = scmp.eq.s32.totalorder %s17, 0
      %p72 = por %p70, %p71
      %p73 = scmp.ne.s32.totalorder %s65, %s67
      %p74 = scmp.eq.s32.totalorder %s22, 3
      %p75 = por %p73, %p74
      %p76 = scmp.ne.s32.totalorder %s67, %s68
      %p77 = scmp.eq.s32.totalorder %s22, 0
      %p78 = por %p76, %p77
      %p79 = scmp.ne.s32.totalorder %s67, %s68
      %p80 = scmp.eq.s32.totalorder %s23, 3
      %p81 = por %p79, %p80
      %p83 = scmp.ne.s32.totalorder %s68, %s82
      %p84 = scmp.eq.s32.totalorder %s23, 0
      %p85 = por %p83, %p84
      %s87 = sadd.s32 %s86, 1
      %p90 = scmp.eq.s32.totalorder %s17, 3
      %p91 = scmp.ne.s32.totalorder %s86, %s88
      %p92 = scmp.eq.s32.totalorder %s17, 0
      %p93 = por %p91, %p92
      %p94 = scmp.ne.s32.totalorder %s86, %s88
      %p95 = scmp.eq.s32.totalorder %s22, 3
      %p96 = por %p94, %p95
      %p97 = scmp.ne.s32.totalorder %s88, %s89
      %p98 = scmp.eq.s32.totalorder %s22, 0
      %p99 = por %p97, %p98
      %p100 = scmp.ne.s32.totalorder %s88, %s89
      %p101 = scmp.eq.s32.totalorder %s23, 3
      %p102 = por %p100, %p101
      %p104 = scmp.ne.s32.totalorder %s89, %s103
      %p105 = scmp.eq.s32.totalorder %s23, 0
      %p106 = por %p104, %p105
      %s107 = ssub.s32 %s24, %s36
      %s108 = ssub.s32 %s25, %s32
      %s109 = sor.u32 %s107, %s108
      %p110 = scmp.eq.s32.totalorder %s109, 0
      %s112 = sadd.s32 %s111, 1
      %s113 = scalar_select %p110, %s111, %s112
      %p116 = pneg %p110
      %p117 = scmp.eq.s32.totalorder %s17, 3
      %p118 = por %p116, %p117
      %p119 = scmp.ne.s32.totalorder %s111, %s114
      %p120 = scmp.eq.s32.totalorder %s17, 0
      %p121 = por %p119, %p120
      %p122 = scmp.ne.s32.totalorder %s111, %s114
      %p123 = scmp.eq.s32.totalorder %s22, 3
      %p124 = por %p122, %p123
      %p125 = scmp.ne.s32.totalorder %s114, %s115
      %p126 = scmp.eq.s32.totalorder %s22, 0
      %p127 = por %p125, %p126
      %p128 = scmp.ne.s32.totalorder %s114, %s115
      %p129 = scmp.eq.s32.totalorder %s23, 3
      %p130 = por %p128, %p129
      %p132 = scmp.ne.s32.totalorder %s115, %s131
      %p133 = scmp.eq.s32.totalorder %s23, 0
      %p134 = por %p132, %p133
      %s135 = smul.u32 %s24, 2
      %s136 = sadd.s32 %s135, %s25
      %s137 = smul.u32 %s36, 2
      %s138 = sadd.s32 %s137, %s32
      %s139 = ssub.s32 %s136, %s138
      %p140 = scmp.eq.s32.totalorder %s139, 0
      %s142 = sadd.s32 %s141, 1
      %s143 = scalar_select %p140, %s141, %s142
      %p146 = pneg %p140
      %p147 = scmp.eq.s32.totalorder %s17, 3
      %p148 = por %p146, %p147
      %p149 = scmp.ne.s32.totalorder %s141, %s144
      %p150 = scmp.eq.s32.totalorder %s17, 0
      %p151 = por %p149, %p150
      %p152 = scmp.ne.s32.totalorder %s141, %s144
      %p153 = scmp.eq.s32.totalorder %s22, 3
      %p154 = por %p152, %p153
      %p155 = scmp.ne.s32.totalorder %s144, %s145
      %p156 = scmp.eq.s32.totalorder %s22, 0
      %p157 = por %p155, %p156
      %p158 = scmp.ne.s32.totalorder %s144, %s145
      %p159 = scmp.eq.s32.totalorder %s23, 3
      %p160 = por %p158, %p159
      %p162 = scmp.ne.s32.totalorder %s145, %s161
      %p163 = scmp.eq.s32.totalorder %s23, 0
      %p164 = por %p162, %p163
      %p165 = scmp.le.s32.totalorder 1, %s17
      %p166 = scmp.lt.s32.totalorder %s17, 5
      %p167 = pnand %p165, %p166
      %p168 = pneg %p167
      // Predicated region
      $region9: #{tpu_custom_call.1} parent=5 // pred_check
        _
      $region10: #{tpu_custom_call.1} parent=5 // pred_check_branch
        %170 = sbr.rel (%p167) target = $region12
      $region11: #{tpu_custom_call.1} parent=5 // pred_region
        %s171 = ssub.s32 %s17, 1
        // Predicated region
        $region13: #{tpu_custom_call.1} parent=11 // pred_check
          %p172 = pneg %p78
        $region14: #{tpu_custom_call.1} parent=11 // pred_check_branch
          %174 = sbr.rel (%p172) target = $region16
        $region15: #{tpu_custom_call.1} parent=11 // pred_region
          _
        $region16: #{tpu_custom_call.1} parent=11 // pred_fallthru
          _
        // Predicated region
        $region17: #{tpu_custom_call.1} parent=11 // pred_check
          %p175 = pneg %p99
        $region18: #{tpu_custom_call.1} parent=11 // pred_check_branch
          %177 = sbr.rel (%p175) target = $region20
        $region19: #{tpu_custom_call.1} parent=11 // pred_region
          _
        $region20: #{tpu_custom_call.1} parent=11 // pred_fallthru
          _
      $region12: #{tpu_custom_call.1} parent=5 // pred_fallthru
        _
      %p178 = scmp.lt.s32.totalorder %s17, 4
      // Predicated region
      $region21: #{tpu_custom_call.1} parent=5 // pred_check
        %p179 = pneg %p178
      $region22: #{tpu_custom_call.1} parent=5 // pred_check_branch
        %181 = sbr.rel (%p179) target = $region24
      $region23: #{tpu_custom_call.1} parent=5 // pred_region
        // Predicated region
        $region25: #{tpu_custom_call.1} parent=23 // pred_check
          %p182 = pneg %p51
        $region26: #{tpu_custom_call.1} parent=23 // pred_check_branch
          %184 = sbr.rel (%p182) target = $region28
        $region27: #{tpu_custom_call.1} parent=23 // pred_region
          %s185 = sand.u32 %s41, 1
          %s186 = scalar_lea.sflag [#allocation3], %s185
          %s187 = sand.u32 %s41, 1
          %s188 = smul.addr %s187, 16
          %s189 = scalar_lea.vmem [#allocation2], %s188
          %s191 = ssub.s32 256, 256
          %192 = vsyncadd %s186, %s191
          %s193 = smul.addr %s24, 4
          %s194 = sadd.s32 %s25, %s193
          %s195 = smul.addr %s194, 128
          %s196 = scalar_lea.hbm %s0, %s195
          %s197 = sshll.u32 %s189, 4
          %s198 = int_to_ptr.vmem [resolvable:$true] %s197
          %203 = dma.hbm_to_vmem [thread:$0]  %s196, 256, %s198, %s186, 256, 128, 8
        $region28: #{tpu_custom_call.1} parent=23 // pred_fallthru
          _
      $region24: #{tpu_custom_call.1} parent=5 // pred_fallthru
        _
      %p204 = scmp.le.s32.totalorder 1, %s17
      %p205 = scmp.lt.s32.totalorder %s17, 5
      %p206 = pnand %p204, %p205
      %p207 = pneg %p206
      // Predicated region
      $region29: #{tpu_custom_call.1} parent=5 // pred_check
        _
      $region30: #{tpu_custom_call.1} parent=5 // pred_check_branch
        %209 = sbr.rel (%p206) target = $region32
      $region31: #{tpu_custom_call.1} parent=5 // pred_region
        %s210 = ssub.s32 %s17, 1
        %s211 = sand.u32 %s44, 1
        %s212 = scalar_lea.sflag [#allocation3], %s211
        %s213 = sand.u32 %s44, 1
        %s214 = smul.addr %s213, 16
        %s215 = scalar_lea.vmem [#allocation2], %s214
        // Predicated region
        $region33: #{tpu_custom_call.1} parent=31 // pred_check
          %p216 = pneg %p57
        $region34: #{tpu_custom_call.1} parent=31 // pred_check_branch
          %218 = sbr.rel (%p216) target = $region36
        $region35: #{tpu_custom_call.1} parent=31 // pred_region
          %219 = dma.done %s212, 256
        $region36: #{tpu_custom_call.1} parent=31 // pred_fallthru
          _
        %s220 = sand.u32 %s44, 1
        %s221 = scalar_lea.sflag [#allocation3], %s220
        %s222 = sand.u32 %s44, 1
        %s223 = smul.addr %s222, 16
        %s224 = scalar_lea.vmem [#allocation2], %s223
        %p225 = pneg %p57
        %p226 = pneg %p54
        %p227 = pneg %p78
        %p228 = pneg %p75
        %p229 = pneg %p99
        %p230 = pneg %p96
        %p231 = pneg %p127
        %p232 = pneg %p124
        %s233 = sand.u32 %s114, 1
        %s234 = scalar_lea.sflag [#allocation4], %s233
        %s235 = sand.u32 %s114, 1
        %s236 = smul.addr %s235, 2
        %s237 = scalar_lea.vmem [#allocation5], %s236
        %p238 = pneg %p157
        %p239 = pneg %p154
        %s240 = smul.u32 %s26, 2
        %s241 = sadd.s32 %s240, %s27
        %p242 = scmp.lt.s32.totalorder %s241, 3
        %s243 = scalar_select %p242, %s241, 3
        %s244 = smul.addr %s243, 4
        %s245 = scalar_lea.vmem %s4, %s244
        %s246 = smul.u32 %s26, 2
        %s247 = sadd.s32 %s246, %s27
        %p248 = scmp.lt.s32.totalorder %s247, 3
        %s249 = scalar_select %p248, %s247, 3
        %s250 = smul.addr %s249, 4
        %s251 = scalar_lea.vmem %s4, %s250
        %s252 = smul.u32 %s26, 2
        %s253 = sadd.s32 %s252, %s27
        %v255 = vld [vmem:[%s1] sm:$0x3]
        %v256 = vld [vmem:[%s215] sm:$0xff]
        %v257 = vld [vmem:[%s215 + $0x8] sm:$0xff]
        %v258 = vpack.c.bf16 %v257, %v256
        %v259 = vld [vmem:[%s2] sm:$0xf]
        %261 = vset.pattern.permute.xlu0 0
        %262 = vperm.xlu0 %261, %v259
        %v263 = vpop.permute.xlu0 %262
        %vm265 = vcmask 130048
        %v267 = vsel %vm265, %v255, 0
        %269 = vmatprep.subr.bf16.mxu0 0
        %270 = vmatpush1.bf16.msra.mxu0 %v258
        %271 = vmatprep.subr.bf16.mxu0 0
        %272 = vmatpush1.bf16.msra.mxu0 0
        %273 = vmatprep.subr.bf16.mxu0 0
        %274 = vmatpush1.bf16.msra.mxu0 0
        %275 = vmatprep.subr.bf16.mxu0 0
        %276 = vmatpush1.bf16.msra.mxu0 0
        %277 = vmatprep.subr.bf16.mxu0 0
        %278 = vmatpush1.bf16.msra.mxu0 0
        %279 = vmatprep.subr.bf16.mxu0 0
        %280 = vmatpush1.bf16.msra.mxu0 0
        %281 = vmatprep.subr.bf16.mxu0 0
        %282 = vmatpush1.bf16.msra.mxu0 0
        %283 = vmatprep.subr.bf16.mxu0 0
        %284 = vmatpush1.bf16.msra.mxu0 0
        %285 = vmatprep.subr.bf16.mxu0 0
        %286 = vmatpush1.bf16.msra.mxu0 0
        %287 = vmatprep.subr.bf16.mxu0 0
        %288 = vmatpush1.bf16.msra.mxu0 0
        %289 = vmatprep.subr.bf16.mxu0 0
        %290 = vmatpush1.bf16.msra.mxu0 0
        %291 = vmatprep.subr.bf16.mxu0 0
        %292 = vmatpush1.bf16.msra.mxu0 0
        %293 = vmatprep.subr.bf16.mxu0 0
        %294 = vmatpush1.bf16.msra.mxu0 0
        %295 = vmatprep.subr.bf16.mxu0 0
        %296 = vmatpush1.bf16.msra.mxu0 0
        %297 = vmatprep.subr.bf16.mxu0 0
        %298 = vmatpush1.bf16.msra.mxu0 0
        %299 = vmatprep.subr.bf16.mxu0 0
        %300 = vmatpush1.bf16.msra.mxu0 0
        %301 = vmatprep.mubr.bf16.mxu0 0
        %302 = vmatmul.mubr.bf16.gmra.mrb[0].mxu0 %v267
        %v303 = vpop.f32.mrb[0].mxu0
        %v304 = vadd.f32 %v263, %v303
        %v305 = vpop.f32.mrb[0].mxu0
        %v306 = vpop.f32.mrb[0].mxu0
        %v307 = vpop.f32.mrb[0].mxu0
        %308 = vdwg.mxu0
        %v309 = vpack.c.bf16 %v304, %v304
        %310 = vst [vmem:[%s237] sm:$0x3] %v309
        %vm311 = vcmask 1043456
        %v312 = vsel %vm311, %v304, 0.0
        %313 = vadd.xlane.f32.xlu0 %v312
        %v314 = vpop.xlane.xlu0 %313
        %v315 = vmul.f32 %v314, 0.0078125
        %v316 = vsub.f32 %v304, %v315
        %v317 = vmul.f32 %v316, %v316
        %v318 = vsel %vm311, %v317, 0.0
        %319 = vadd.xlane.f32.xlu0 %v318
        %v320 = vpop.xlane.xlu0 %319
        %vm321 = vcmask 7168
        %v322 = vsel %vm321, %v314, %v320
        %vm323 = vcmask 11264
        %324 = vst.msk [vmem:[%s251] sm:$0xf] %vm323, %v322
        %s325 = sand.u32 %s114, 1
        %s326 = scalar_lea.sflag [#allocation4], %s325
        %s327 = sand.u32 %s114, 1
        %s328 = smul.addr %s327, 2
        %s329 = scalar_lea.vmem [#allocation5], %s328
        %s330 = smul.u32 %s26, 2
        %s331 = sadd.s32 %s330, %s27
        %p332 = scmp.lt.s32.totalorder %s331, 3
        %s333 = scalar_select %p332, %s331, 3
        %s334 = smul.addr %s333, 4
        %s335 = scalar_lea.vmem %s4, %s334
        // Predicated region
        $region37: #{tpu_custom_call.1} parent=31 // pred_check
          %p336 = pneg %p124
        $region38: #{tpu_custom_call.1} parent=31 // pred_check_branch
          %338 = sbr.rel (%p336) target = $region40
        $region39: #{tpu_custom_call.1} parent=31 // pred_region
          %s340 = ssub.s32 32, 32
          %341 = vsyncadd %s326, %s340
          %s342 = smul.addr %s26, 2
          %s343 = sadd.s32 %s27, %s342
          %s344 = smul.addr %s343, 32
          %s345 = scalar_lea.hbm %s3, %s344
          %s347 = sshll.u32 %s329, 4
          %s348 = int_to_ptr.vmem [resolvable:$true] %s347
          %350 = dma.vmem_to_hbm [thread:$0]  %s348, 32, %s345, %s326
        $region40: #{tpu_custom_call.1} parent=31 // pred_fallthru
          _
        // Predicated region
        $region41: #{tpu_custom_call.1} parent=31 // pred_check
          %p351 = pneg %p154
        $region42: #{tpu_custom_call.1} parent=31 // pred_check_branch
          %353 = sbr.rel (%p351) target = $region44
        $region43: #{tpu_custom_call.1} parent=31 // pred_region
          %s354 = smul.u32 %s26, 2
          %s355 = sadd.s32 %s354, %s27
        $region44: #{tpu_custom_call.1} parent=31 // pred_fallthru
          _
      $region32: #{tpu_custom_call.1} parent=5 // pred_fallthru
        _
      %p356 = scmp.le.s32.totalorder 2, %s17
      // Predicated region
      $region45: #{tpu_custom_call.1} parent=5 // pred_check
        %p357 = pneg %p356
      $region46: #{tpu_custom_call.1} parent=5 // pred_check_branch
        %359 = sbr.rel (%p357) target = $region48
      $region47: #{tpu_custom_call.1} parent=5 // pred_region
        %s360 = ssub.s32 %s17, 2
        // Predicated region
        $region49: #{tpu_custom_call.1} parent=47 // pred_check
          %p361 = pneg %p130
        $region50: #{tpu_custom_call.1} parent=47 // pred_check_branch
          %363 = sbr.rel (%p361) target = $region52
        $region51: #{tpu_custom_call.1} parent=47 // pred_region
          %s364 = sand.u32 %s115, 1
          %s365 = scalar_lea.sflag [#allocation4], %s364
          %s366 = sand.u32 %s115, 1
          %s367 = smul.addr %s366, 2
          %s368 = scalar_lea.vmem [#allocation5], %s367
          %369 = dma.done %s365, 32
        $region52: #{tpu_custom_call.1} parent=47 // pred_fallthru
          _
        // Predicated region
        $region53: #{tpu_custom_call.1} parent=47 // pred_check
          %p370 = pneg %p160
        $region54: #{tpu_custom_call.1} parent=47 // pred_check_branch
          %372 = sbr.rel (%p370) target = $region56
        $region55: #{tpu_custom_call.1} parent=47 // pred_region
          %s373 = smul.u32 %s28, 2
          %s374 = sadd.s32 %s373, %s29
          %p375 = scmp.lt.s32.totalorder %s374, 3
          %s376 = scalar_select %p375, %s374, 3
          %s377 = smul.addr %s376, 4
          %s378 = scalar_lea.vmem %s4, %s377
        $region56: #{tpu_custom_call.1} parent=47 // pred_fallthru
          _
      $region48: #{tpu_custom_call.1} parent=5 // pred_fallthru
        _
    $region6: #{tpu_custom_call.1} parent=1 // loop_footer
      %s21 = sadd.s32 1, %s17
    $region7: #{tpu_custom_call.1} parent=1 // loop_footer_branch
      %16 = sbr.rel target = $region3
    $region8: #{tpu_custom_call.1} parent=1 // loop_exit
      _
    %379 = vsyncpa [#allocation3], 1
    %s380 = scalar_lea.sflag [#allocation3], 1
    %381 = vsyncpa %s380, 1
    %382 = vsyncpa [#allocation4], 1
    %s383 = scalar_lea.sflag [#allocation4], 1
    %384 = vsyncpa %s383, 1

</llo_original>
